<compile_context>
chip_gen: v7x
topology: tpu7x:2x2x1
jax: 0.10.0
libtpu: 0.0.40
codegen_flags: <defaults>
</compile_context>

<pallas_src>
import functools

import jax
import jax.numpy as jnp
from jax.experimental import pallas as pl
from jax.experimental.pallas import tpu as pltpu


# ---------------------------------------------------------------------------
# Pallas kernel: entire forward pass for one row-tile.
# ---------------------------------------------------------------------------
def _scopen_kernel(x_ref, bid_ref,
                   we1, be1, we2, be2,            # encoder layers
                   wmu, bmu,                       # _enc_mu
                   wd1z, wd1b, bd1, wd2, bd2,      # decoder (first layer split z/batch)
                   whead, bhead,                   # fused [mean|disp|pi|mask] head
                   wcomb,                          # prototype weights, shifted by z_dim, padded, 1/tau folded
                   heads_o, comb_o,
                   *, input_dim, z_dim, num_batches):
    f32 = jnp.float32
    bf16 = jnp.bfloat16

    x = x_ref[...]                                 # [tile_n, input_dim] f32

    # ---- encoder ----
    # TODO(synk): GaussianNoise (train-time only) is treated as identity.
    h = jnp.dot(x.astype(bf16), we1[...], preferred_element_type=f32) + be1[...]
    h = jnp.maximum(h, 0.0)
    h = jnp.dot(h.astype(bf16), we2[...], preferred_element_type=f32) + be2[...]
    h = jnp.maximum(h, 0.0)

    # ---- latent ----
    z = jnp.dot(h.astype(bf16), wmu[...], preferred_element_type=f32) + bmu[...]

    # ---- decoder on concat([z, one_hot(batch)]) ----
    # concat([z, onehot]) @ W1 == z @ W1[:z_dim] + W1[z_dim + batch_id, :]
    # num_batches is tiny -> per-row select (static unroll) instead of a matmul.
    bids = bid_ref[...]                            # [tile_n, 1] int32
    wb = wd1b[...]                                 # [num_batches, dec0] f32
    badd = jnp.zeros((x.shape[0], wb.shape[1]), f32)
    for b in range(num_batches):
        badd = badd + (bids == b).astype(f32) * wb[b:b + 1, :]

    h = (jnp.dot(z.astype(bf16), wd1z[...], preferred_element_type=f32)
         + bd1[...] + badd)
    h = jnp.maximum(h, 0.0)
    h = jnp.dot(h.astype(bf16), wd2[...], preferred_element_type=f32) + bd2[...]
    h = jnp.maximum(h, 0.0)

    # ---- fused reconstruction heads: one matmul + lane-masked activation ----
    ho = jnp.dot(h.astype(bf16), whead[...], preferred_element_type=f32) + bhead[...]
    d = input_dim
    col = jax.lax.broadcasted_iota(jnp.int32, ho.shape, 1)
    mean_v = jnp.clip(jnp.exp(ho), 1e-5, 1e6)             # MeanAct
    disp_v = jnp.clip(jax.nn.softplus(ho), 1e-4, 1e4)     # DispAct
    sig_v = jax.nn.sigmoid(ho)                            # pi / mask
    heads_o[...] = jnp.where(col < d, mean_v,
                             jnp.where(col < 2 * d, disp_v, sig_v))

    # ---- combined [z | out_s | out_t | pad] lane-dense slab ----
    # wcomb has zero columns in lanes [0, z_dim), prototype weights (with 1/tau
    # folded in) in lanes [z_dim, z_dim+C), zeros beyond.
    sumsq = jnp.sum(z * z, axis=1, keepdims=True)
    zn = z * jax.lax.rsqrt(jnp.maximum(sumsq, 1e-24))      # == z / max(||z||, 1e-12)
    comb_o[...] = jnp.dot(zn.astype(bf16), wcomb[...], preferred_element_type=f32)
    comb_o[:, pl.ds(0, z_dim)] = z                          # fill the zero lanes with z


# ---------------------------------------------------------------------------
# One-time parameter packing (hoisted out of the per-call forward).
# ---------------------------------------------------------------------------
def pack_params(params, *, z_dim, tau):
    bf16 = jnp.bfloat16
    shared = params["wsrc"].shape[1]
    total = params["wtgt"].shape[1]
    input_dim = params["wmean"].shape[1]
    num_batches = params["wd1b"].shape[0]
    c = shared + total
    out_w = ((z_dim + c + 127) // 128) * 128               # lane-dense combined slab

    whead = jnp.concatenate(
        [params["wmean"], params["wdisp"], params["wpi"], params["wmask"]],
        axis=1).astype(bf16)
    bhead = jnp.concatenate(
        [params["bmean"], params["bdisp"], params["bpi"], params["bmask"]], axis=1)

    # Prototype weights with 1/tau folded in, shifted right by z_dim lanes and
    # zero-padded to out_w so the matmul output drops straight into the slab.
    wproto = jnp.concatenate([params["wsrc"], params["wtgt"]], axis=1) * (1.0 / float(tau))
    wcomb = jnp.pad(wproto, ((0, 0), (z_dim, out_w - z_dim - c))).astype(bf16)

    packed = dict(
        we1=params["we1"].astype(bf16), be1=params["be1"],
        we2=params["we2"].astype(bf16), be2=params["be2"],
        wmu=params["wmu"].astype(bf16), bmu=params["bmu"],
        wd1z=params["wd1z"].astype(bf16), wd1b=params["wd1b"], bd1=params["bd1"],
        wd2=params["wd2"].astype(bf16), bd2=params["bd2"],
        whead=whead, bhead=bhead, wcomb=wcomb)
    meta = dict(z_dim=z_dim, shared=shared, total=total, out_w=out_w,
                input_dim=input_dim, num_batches=num_batches, tau=float(tau))
    return packed, meta


# ---------------------------------------------------------------------------
# Wrapper: row-tiled grid, VMEM-resident weights, lane-dense fused outputs.
# ---------------------------------------------------------------------------
def scopen1_forward(x, batch, packed, meta, *, tile_n=1024):
    f32 = jnp.float32
    n, input_dim = x.shape
    assert input_dim == meta["input_dim"]
    z_dim, out_w = meta["z_dim"], meta["out_w"]
    shared, total = meta["shared"], meta["total"]
    num_batches = meta["num_batches"]

    # batch is the [N, num_batches] one-hot indicator from the PyTorch forward;
    # reduce it to integer ids for the in-kernel row select.
    # TODO(synk): non-one-hot `batch` encodings would need the original dense dot.
    batch_ids = jnp.argmax(batch, axis=1).astype(jnp.int32).reshape(-1, 1)

    # ---- row tiling: big tiles to amortize per-step overhead, capped so
    # double-buffered blocks + resident weights stay well inside scoped VMEM.
    weight_bytes = sum(int(a.size) * a.dtype.itemsize for a in packed.values())
    row_bytes = 4 * (input_dim + 1 + 4 * input_dim + out_w) * 2   # f32, double-buffered
    tile_n = min(tile_n, ((n + 7) // 8) * 8)
    budget = 24 * 1024 * 1024 - weight_bytes
    while tile_n > 8 and tile_n * row_bytes > budget:
        tile_n //= 2
    tile_n = max(8, (tile_n // 8) * 8)

    n_pad = pl.cdiv(n, tile_n) * tile_n
    xp = jnp.pad(x.astype(f32), ((0, n_pad - n), (0, 0)))
    bidp = jnp.pad(batch_ids, ((0, n_pad - n), (0, 0)))

    weight_order = ("we1", "be1", "we2", "be2", "wmu", "bmu",
                    "wd1z", "wd1b", "bd1", "wd2", "bd2",
                    "whead", "bhead", "wcomb")
    weights = tuple(packed[k] for k in weight_order)
    args = (xp, bidp) + weights

    def row_spec(width):
        return pl.BlockSpec((tile_n, width), lambda i: (i, 0))

    def resident_spec(a):                           # constant block -> stays in VMEM
        return pl.BlockSpec(a.shape, lambda i: (0, 0))

    in_specs = ([row_spec(input_dim), row_spec(1)]
                + [resident_spec(a) for a in weights])

    out_shapes = (
        jax.ShapeDtypeStruct((n_pad, 4 * input_dim), f32),   # [mean|disp|pi|mask]
        jax.ShapeDtypeStruct((n_pad, out_w), f32),            # [z|out_s|out_t|pad]
    )
    out_specs = (row_spec(4 * input_dim), row_spec(out_w))

    kernel = functools.partial(_scopen_kernel, input_dim=input_dim,
                               z_dim=z_dim, num_batches=num_batches)

    # Right-sized VMEM limit (footprint + headroom), capped at v7x's 64 MiB.
    vmem_limit = int(min(64 * 1024 * 1024,
                         max(8 * 1024 * 1024,
                             weight_bytes + tile_n * row_bytes + (2 << 20))))

    heads, comb = pl.pallas_call(
        kernel,
        out_shape=out_shapes,
        grid=(n_pad // tile_n,),
        in_specs=in_specs,
        out_specs=out_specs,
        compiler_params=pltpu.CompilerParams(
            dimension_semantics=("parallel",),       # row tiles shard across TCs (v7x)
            vmem_limit_bytes=vmem_limit),
    )(*args)

    # ---- slice padded / fused outputs back apart (wrapper-side, free XLA slices) ----
    heads = heads[:n]
    comb = comb[:n]
    d = input_dim
    mean = heads[:, 0 * d:1 * d]
    disp = heads[:, 1 * d:2 * d]
    pi = heads[:, 2 * d:3 * d]
    mask = heads[:, 3 * d:4 * d]
    z = comb[:, :z_dim]
    out_s = comb[:, z_dim:z_dim + shared]
    out_t = comb[:, z_dim + shared:z_dim + shared + total]
    return z, mean, disp, pi, mask, out_s, out_t


# ---------------------------------------------------------------------------
# Deterministic parameter construction (synthetic weights, no checkpoint).
# ---------------------------------------------------------------------------
def init_params(key, input_dim, z_dim, shared_classes, total_classes,
                num_batches, encode_layers, decode_layers):
    keys = iter(jax.random.split(key, 64))

    def linear(in_d, out_d):
        w = 0.1 * jax.random.normal(next(keys), (in_d, out_d), jnp.float32)
        b = 0.01 * jax.random.normal(next(keys), (1, out_d), jnp.float32)
        return w, b

    p = {}
    p["we1"], p["be1"] = linear(input_dim, encode_layers[0])
    p["we2"], p["be2"] = linear(encode_layers[0], encode_layers[1])
    p["wmu"], p["bmu"] = linear(encode_layers[1], z_dim)
    wd1, bd1 = linear(z_dim + num_batches, decode_layers[0])
    p["wd1z"], p["wd1b"], p["bd1"] = wd1[:z_dim, :], wd1[z_dim:, :], bd1
    p["wd2"], p["bd2"] = linear(decode_layers[0], decode_layers[1])
    p["wmean"], p["bmean"] = linear(decode_layers[1], input_dim)
    p["wdisp"], p["bdisp"] = linear(decode_layers[1], input_dim)
    p["wpi"], p["bpi"] = linear(decode_layers[1], input_dim)
    p["wmask"], p["bmask"] = linear(decode_layers[1], input_dim)

    # Prototype classifiers: weight [z_dim, classes], each class column
    # L2-normalized over z_dim (matches Prototype.weight_norm on [classes, z_dim]).
    def prototype(classes):
        w = jax.random.normal(next(keys), (z_dim, classes), jnp.float32)
        return w / jnp.linalg.norm(w, axis=0, keepdims=True)

    p["wsrc"] = prototype(shared_classes)
    p["wtgt"] = prototype(total_classes)
    return p


# ---------------------------------------------------------------------------
# Pure-f32 JAX reference of the PyTorch forward (for a loose sanity check).
# ---------------------------------------------------------------------------
def reference_forward(x, batch, params, *, z_dim, tau):
    relu = lambda v: jnp.maximum(v, 0.0)
    h = relu(x @ params["we1"] + params["be1"])
    h = relu(h @ params["we2"] + params["be2"])
    z = h @ params["wmu"] + params["bmu"]
    wd1 = jnp.concatenate([params["wd1z"], params["wd1b"]], axis=0)
    h = relu(jnp.concatenate([z, batch], axis=1) @ wd1 + params["bd1"])
    h = relu(h @ params["wd2"] + params["bd2"])
    mean = jnp.clip(jnp.exp(h @ params["wmean"] + params["bmean"]), 1e-5, 1e6)
    disp = jnp.clip(jax.nn.softplus(h @ params["wdisp"] + params["bdisp"]), 1e-4, 1e4)
    pi = jax.nn.sigmoid(h @ params["wpi"] + params["bpi"])
    mask = jax.nn.sigmoid(h @ params["wmask"] + params["bmask"])
    zn = z / jnp.maximum(jnp.linalg.norm(z, axis=1, keepdims=True), 1e-12)
    out_s = zn @ params["wsrc"] / tau
    out_t = zn @ params["wtgt"] / tau
    return z, mean, disp, pi, mask, out_s, out_t


if __name__ == "__main__":
    # Small, module-consistent shapes.
    N = 8
    INPUT_DIM = 32
    Z_DIM = 8
    SHARED_CLASSES = 4
    TOTAL_CLASSES = 6
    NUM_BATCHES = 2
    ENCODE_LAYERS = [32, 16]
    DECODE_LAYERS = [16, 32]
    TAU = 1.0

    key = jax.random.PRNGKey(0)
    k_param, k_x, k_b = jax.random.split(key, 3)

    params = init_params(k_param, INPUT_DIM, Z_DIM, SHARED_CLASSES,
                         TOTAL_CLASSES, NUM_BATCHES, ENCODE_LAYERS, DECODE_LAYERS)
    packed, meta = pack_params(params, z_dim=Z_DIM, tau=TAU)   # one-time packing

    x = jax.random.normal(k_x, (N, INPUT_DIM), jnp.float32)
    batch_ids = jax.random.randint(k_b, (N,), 0, NUM_BATCHES)
    batch = jax.nn.one_hot(batch_ids, NUM_BATCHES, dtype=jnp.float32)

    outs = scopen1_forward(x, batch, packed, meta)
    outs = jax.block_until_ready(outs)
    z, mean, disp, pi, mask, out_s, out_t = outs

    assert z.shape == (N, Z_DIM)
    assert mean.shape == (N, INPUT_DIM) and disp.shape == (N, INPUT_DIM)
    assert pi.shape == (N, INPUT_DIM) and mask.shape == (N, INPUT_DIM)
    assert out_s.shape == (N, SHARED_CLASSES) and out_t.shape == (N, TOTAL_CLASSES)

    # Loose numeric check vs. pure-f32 reference (kernel uses bf16 MXU casts).
    ref = reference_forward(x, batch, params, z_dim=Z_DIM, tau=TAU)
    for got, want in zip(outs, ref):
        assert got.shape == want.shape
        assert bool(jnp.all(jnp.isfinite(got)))
        assert bool(jnp.allclose(got, want, rtol=0.1, atol=0.05))

    print("KERNEL_OK")
</pallas_src>

<mosaic_0001>
module attributes {stable_mosaic.version = 11 : i64} {
  func.func @_scopen_kernel(%arg0: i32, %arg1: memref<8x32xf32, #tpu.memory_space<vmem>>, %arg2: memref<8x1xi32, #tpu.memory_space<vmem>>, %arg3: memref<32x32xbf16, #tpu.memory_space<vmem>>, %arg4: memref<1x32xf32, #tpu.memory_space<vmem>>, %arg5: memref<32x16xbf16, #tpu.memory_space<vmem>>, %arg6: memref<1x16xf32, #tpu.memory_space<vmem>>, %arg7: memref<16x8xbf16, #tpu.memory_space<vmem>>, %arg8: memref<1x8xf32, #tpu.memory_space<vmem>>, %arg9: memref<8x16xbf16, #tpu.memory_space<vmem>>, %arg10: memref<2x16xf32, #tpu.memory_space<vmem>>, %arg11: memref<1x16xf32, #tpu.memory_space<vmem>>, %arg12: memref<16x32xbf16, #tpu.memory_space<vmem>>, %arg13: memref<1x32xf32, #tpu.memory_space<vmem>>, %arg14: memref<32x128xbf16, #tpu.memory_space<vmem>>, %arg15: memref<1x128xf32, #tpu.memory_space<vmem>>, %arg16: memref<8x128xbf16, #tpu.memory_space<vmem>>, %arg17: memref<8x128xf32, #tpu.memory_space<vmem>>, %arg18: memref<8x128xf32, #tpu.memory_space<vmem>>) attributes {dimension_semantics = [#tpu.dimension_semantics<parallel>], iteration_bounds = array<i64: 1>, scalar_prefetch = 0 : i64, scratch_operands = 0 : i64, tpu.core_type = #tpu.core_type<tc>, window_params = [{transform_indices = @transform_0, window_bounds = array<i64: 8, 32>}, {transform_indices = @transform_1, window_bounds = array<i64: 8, 1>}, {pipeline_mode = #tpu.pipeline_mode<synchronous>, transform_indices = @transform_2, window_bounds = array<i64: 32, 32>}, {pipeline_mode = #tpu.pipeline_mode<synchronous>, transform_indices = @transform_3, window_bounds = array<i64: 1, 32>}, {pipeline_mode = #tpu.pipeline_mode<synchronous>, transform_indices = @transform_4, window_bounds = array<i64: 32, 16>}, {pipeline_mode = #tpu.pipeline_mode<synchronous>, transform_indices = @transform_5, window_bounds = array<i64: 1, 16>}, {pipeline_mode = #tpu.pipeline_mode<synchronous>, transform_indices = @transform_6, window_bounds = array<i64: 16, 8>}, {pipeline_mode = #tpu.pipeline_mode<synchronous>, transform_indices = @transform_7, window_bounds = array<i64: 1, 8>}, {pipeline_mode = #tpu.pipeline_mode<synchronous>, transform_indices = @transform_8, window_bounds = array<i64: 8, 16>}, {pipeline_mode = #tpu.pipeline_mode<synchronous>, transform_indices = @transform_9, window_bounds = array<i64: 2, 16>}, {pipeline_mode = #tpu.pipeline_mode<synchronous>, transform_indices = @transform_10, window_bounds = array<i64: 1, 16>}, {pipeline_mode = #tpu.pipeline_mode<synchronous>, transform_indices = @transform_11, window_bounds = array<i64: 16, 32>}, {pipeline_mode = #tpu.pipeline_mode<synchronous>, transform_indices = @transform_12, window_bounds = array<i64: 1, 32>}, {pipeline_mode = #tpu.pipeline_mode<synchronous>, transform_indices = @transform_13, window_bounds = array<i64: 32, 128>}, {pipeline_mode = #tpu.pipeline_mode<synchronous>, transform_indices = @transform_14, window_bounds = array<i64: 1, 128>}, {pipeline_mode = #tpu.pipeline_mode<synchronous>, transform_indices = @transform_15, window_bounds = array<i64: 8, 128>}, {transform_indices = @transform_16, window_bounds = array<i64: 8, 128>}, {transform_indices = @transform_17, window_bounds = array<i64: 8, 128>}]} {
    %c0 = arith.constant 0 : index
    %c0_0 = arith.constant 0 : index
    %0 = vector.load %arg1[%c0, %c0_0] : memref<8x32xf32, #tpu.memory_space<vmem>>, vector<8x32xf32>
    %1 = arith.truncf %0 : vector<8x32xf32> to vector<8x32xbf16>
    %c0_1 = arith.constant 0 : index
    %c0_2 = arith.constant 0 : index
    %2 = vector.load %arg3[%c0_1, %c0_2] : memref<32x32xbf16, #tpu.memory_space<vmem>>, vector<32x32xbf16>
    %cst = arith.constant dense<0.000000e+00> : vector<8x32xf32>
    %3 = tpu.matmul %1, %2, %cst {dimension_numbers = #tpu.dot_dimension_numbers<[1], [0], [0], [1], [0, 0, 1, 1], [], []>} : vector<8x32xbf16>, vector<32x32xbf16>, vector<8x32xf32> -> vector<8x32xf32>
    %c0_3 = arith.constant 0 : index
    %c0_4 = arith.constant 0 : index
    %4 = vector.load %arg4[%c0_3, %c0_4] : memref<1x32xf32, #tpu.memory_space<vmem>>, vector<1x32xf32>
    %5 = vector.broadcast %4 : vector<1x32xf32> to vector<8x32xf32>
    %6 = arith.addf %3, %5 : vector<8x32xf32>
    %cst_5 = arith.constant 0.000000e+00 : f32
    %7 = vector.broadcast %cst_5 : f32 to vector<8x32xf32>
    %8 = arith.maximumf %6, %7 : vector<8x32xf32>
    %9 = arith.truncf %8 : vector<8x32xf32> to vector<8x32xbf16>
    %c0_6 = arith.constant 0 : index
    %c0_7 = arith.constant 0 : index
    %10 = vector.load %arg5[%c0_6, %c0_7] : memref<32x16xbf16, #tpu.memory_space<vmem>>, vector<32x16xbf16>
    %cst_8 = arith.constant dense<0.000000e+00> : vector<8x16xf32>
    %11 = tpu.matmul %9, %10, %cst_8 {dimension_numbers = #tpu.dot_dimension_numbers<[1], [0], [0], [1], [0, 0, 1, 1], [], []>} : vector<8x32xbf16>, vector<32x16xbf16>, vector<8x16xf32> -> vector<8x16xf32>
    %c0_9 = arith.constant 0 : index
    %c0_10 = arith.constant 0 : index
    %12 = vector.load %arg6[%c0_9, %c0_10] : memref<1x16xf32, #tpu.memory_space<vmem>>, vector<1x16xf32>
    %13 = vector.broadcast %12 : vector<1x16xf32> to vector<8x16xf32>
    %14 = arith.addf %11, %13 : vector<8x16xf32>
    %cst_11 = arith.constant 0.000000e+00 : f32
    %15 = vector.broadcast %cst_11 : f32 to vector<8x16xf32>
    %16 = arith.maximumf %14, %15 : vector<8x16xf32>
    %17 = arith.truncf %16 : vector<8x16xf32> to vector<8x16xbf16>
    %c0_12 = arith.constant 0 : index
    %c0_13 = arith.constant 0 : index
    %18 = vector.load %arg7[%c0_12, %c0_13] : memref<16x8xbf16, #tpu.memory_space<vmem>>, vector<16x8xbf16>
    %cst_14 = arith.constant dense<0.000000e+00> : vector<8x8xf32>
    %19 = tpu.matmul %17, %18, %cst_14 {dimension_numbers = #tpu.dot_dimension_numbers<[1], [0], [0], [1], [0, 0, 1, 1], [], []>} : vector<8x16xbf16>, vector<16x8xbf16>, vector<8x8xf32> -> vector<8x8xf32>
    %c0_15 = arith.constant 0 : index
    %c0_16 = arith.constant 0 : index
    %20 = vector.load %arg8[%c0_15, %c0_16] : memref<1x8xf32, #tpu.memory_space<vmem>>, vector<1x8xf32>
    %21 = vector.broadcast %20 : vector<1x8xf32> to vector<8x8xf32>
    %22 = arith.addf %19, %21 : vector<8x8xf32>
    %c0_17 = arith.constant 0 : index
    %c0_18 = arith.constant 0 : index
    %23 = vector.load %arg2[%c0_17, %c0_18] : memref<8x1xi32, #tpu.memory_space<vmem>>, vector<8x1xi32>
    %c0_19 = arith.constant 0 : index
    %c0_20 = arith.constant 0 : index
    %24 = vector.load %arg10[%c0_19, %c0_20] : memref<2x16xf32, #tpu.memory_space<vmem>>, vector<2x16xf32>
    %cst_21 = arith.constant 0.000000e+00 : f32
    %25 = vector.broadcast %cst_21 : f32 to vector<8x16xf32>
    %c0_i32 = arith.constant 0 : i32
    %26 = vector.broadcast %c0_i32 : i32 to vector<8x1xi32>
    %27 = arith.cmpi eq, %23, %26 : vector<8x1xi32>
    %28 = arith.extui %27 : vector<8x1xi1> to vector<8x1xi32>
    %29 = arith.sitofp %28 : vector<8x1xi32> to vector<8x1xf32>
    %30 = vector.extract_strided_slice %24 {offsets = [0, 0], sizes = [1, 16], strides = [1, 1]} : vector<2x16xf32> to vector<1x16xf32>
    %31 = vector.broadcast %29 : vector<8x1xf32> to vector<8x16xf32>
    %32 = vector.broadcast %30 : vector<1x16xf32> to vector<8x16xf32>
    %33 = arith.mulf %31, %32 : vector<8x16xf32>
    %34 = arith.addf %25, %33 : vector<8x16xf32>
    %c1_i32 = arith.constant 1 : i32
    %35 = vector.broadcast %c1_i32 : i32 to vector<8x1xi32>
    %36 = arith.cmpi eq, %23, %35 : vector<8x1xi32>
    %37 = arith.extui %36 : vector<8x1xi1> to vector<8x1xi32>
    %38 = arith.sitofp %37 : vector<8x1xi32> to vector<8x1xf32>
    %39 = vector.extract_strided_slice %24 {offsets = [1, 0], sizes = [1, 16], strides = [1, 1]} : vector<2x16xf32> to vector<1x16xf32>
    %40 = vector.broadcast %38 : vector<8x1xf32> to vector<8x16xf32>
    %41 = vector.broadcast %39 : vector<1x16xf32> to vector<8x16xf32>
    %42 = arith.mulf %40, %41 : vector<8x16xf32>
    %43 = arith.addf %34, %42 : vector<8x16xf32>
    %44 = arith.truncf %22 : vector<8x8xf32> to vector<8x8xbf16>
    %c0_22 = arith.constant 0 : index
    %c0_23 = arith.constant 0 : index
    %45 = vector.load %arg9[%c0_22, %c0_23] : memref<8x16xbf16, #tpu.memory_space<vmem>>, vector<8x16xbf16>
    %cst_24 = arith.constant dense<0.000000e+00> : vector<8x16xf32>
    %46 = tpu.matmul %44, %45, %cst_24 {dimension_numbers = #tpu.dot_dimension_numbers<[1], [0], [0], [1], [0, 0, 1, 1], [], []>} : vector<8x8xbf16>, vector<8x16xbf16>, vector<8x16xf32> -> vector<8x16xf32>
    %c0_25 = arith.constant 0 : index
    %c0_26 = arith.constant 0 : index
    %47 = vector.load %arg11[%c0_25, %c0_26] : memref<1x16xf32, #tpu.memory_space<vmem>>, vector<1x16xf32>
    %48 = vector.broadcast %47 : vector<1x16xf32> to vector<8x16xf32>
    %49 = arith.addf %46, %48 : vector<8x16xf32>
    %50 = arith.addf %49, %43 : vector<8x16xf32>
    %cst_27 = arith.constant 0.000000e+00 : f32
    %51 = vector.broadcast %cst_27 : f32 to vector<8x16xf32>
    %52 = arith.maximumf %50, %51 : vector<8x16xf32>
    %53 = arith.truncf %52 : vector<8x16xf32> to vector<8x16xbf16>
    %c0_28 = arith.constant 0 : index
    %c0_29 = arith.constant 0 : index
    %54 = vector.load %arg12[%c0_28, %c0_29] : memref<16x32xbf16, #tpu.memory_space<vmem>>, vector<16x32xbf16>
    %cst_30 = arith.constant dense<0.000000e+00> : vector<8x32xf32>
    %55 = tpu.matmul %53, %54, %cst_30 {dimension_numbers = #tpu.dot_dimension_numbers<[1], [0], [0], [1], [0, 0, 1, 1], [], []>} : vector<8x16xbf16>, vector<16x32xbf16>, vector<8x32xf32> -> vector<8x32xf32>
    %c0_31 = arith.constant 0 : index
    %c0_32 = arith.constant 0 : index
    %56 = vector.load %arg13[%c0_31, %c0_32] : memref<1x32xf32, #tpu.memory_space<vmem>>, vector<1x32xf32>
    %57 = vector.broadcast %56 : vector<1x32xf32> to vector<8x32xf32>
    %58 = arith.addf %55, %57 : vector<8x32xf32>
    %cst_33 = arith.constant 0.000000e+00 : f32
    %59 = vector.broadcast %cst_33 : f32 to vector<8x32xf32>
    %60 = arith.maximumf %58, %59 : vector<8x32xf32>
    %61 = arith.truncf %60 : vector<8x32xf32> to vector<8x32xbf16>
    %c0_34 = arith.constant 0 : index
    %c0_35 = arith.constant 0 : index
    %62 = vector.load %arg14[%c0_34, %c0_35] : memref<32x128xbf16, #tpu.memory_space<vmem>>, vector<32x128xbf16>
    %cst_36 = arith.constant dense<0.000000e+00> : vector<8x128xf32>
    %63 = tpu.matmul %61, %62, %cst_36 {dimension_numbers = #tpu.dot_dimension_numbers<[1], [0], [0], [1], [0, 0, 1, 1], [], []>} : vector<8x32xbf16>, vector<32x128xbf16>, vector<8x128xf32> -> vector<8x128xf32>
    %c0_37 = arith.constant 0 : index
    %c0_38 = arith.constant 0 : index
    %64 = vector.load %arg15[%c0_37, %c0_38] : memref<1x128xf32, #tpu.memory_space<vmem>>, vector<1x128xf32>
    %65 = vector.broadcast %64 : vector<1x128xf32> to vector<8x128xf32>
    %66 = arith.addf %63, %65 : vector<8x128xf32>
    %67 = tpu.iota {dimensions = array<i32: 1>} : vector<8x128xi32>
    %68 = math.exp %66 : vector<8x128xf32>
    %cst_39 = arith.constant 9.99999974E-6 : f32
    %cst_40 = arith.constant 1.000000e+06 : f32
    %69 = vector.broadcast %cst_39 : f32 to vector<8x128xf32>
    %70 = arith.maximumf %69, %68 : vector<8x128xf32>
    %71 = vector.broadcast %cst_40 : f32 to vector<8x128xf32>
    %72 = arith.minimumf %71, %70 : vector<8x128xf32>
    %cst_41 = arith.constant 0.000000e+00 : f32
    %73 = vector.broadcast %cst_41 : f32 to vector<8x128xf32>
    %74 = arith.maximumf %66, %73 : vector<8x128xf32>
    %75 = vector.broadcast %cst_41 : f32 to vector<8x128xf32>
    %76 = arith.subf %66, %75 : vector<8x128xf32>
    %77 = arith.cmpf one, %76, %76 : vector<8x128xf32>
    %78 = vector.broadcast %cst_41 : f32 to vector<8x128xf32>
    %79 = arith.addf %66, %78 : vector<8x128xf32>
    %80 = math.absf %76 : vector<8x128xf32>
    %cst_42 = arith.constant 0.000000e+00 : f32
    %81 = vector.broadcast %cst_42 : f32 to vector<8x128xf32>
    %82 = arith.subf %81, %80 : vector<8x128xf32>
    %83 = math.exp %82 : vector<8x128xf32>
    %84 = math.log1p %83 : vector<8x128xf32>
    %85 = arith.addf %74, %84 : vector<8x128xf32>
    %86 = arith.select %77, %79, %85 : vector<8x128xi1>, vector<8x128xf32>
    %cst_43 = arith.constant 9.99999974E-5 : f32
    %cst_44 = arith.constant 1.000000e+04 : f32
    %87 = vector.broadcast %cst_43 : f32 to vector<8x128xf32>
    %88 = arith.maximumf %87, %86 : vector<8x128xf32>
    %89 = vector.broadcast %cst_44 : f32 to vector<8x128xf32>
    %90 = arith.minimumf %89, %88 : vector<8x128xf32>
    %91 = arith.negf %66 : vector<8x128xf32>
    %92 = math.exp %91 : vector<8x128xf32>
    %cst_45 = arith.constant 1.000000e+00 : f32
    %93 = vector.broadcast %cst_45 : f32 to vector<8x128xf32>
    %94 = arith.addf %93, %92 : vector<8x128xf32>
    %95 = arith.divf %93, %94 : vector<8x128xf32>
    %c32_i32 = arith.constant 32 : i32
    %96 = vector.broadcast %c32_i32 : i32 to vector<8x128xi32>
    %97 = arith.cmpi slt, %67, %96 : vector<8x128xi32>
    %c64_i32 = arith.constant 64 : i32
    %98 = vector.broadcast %c64_i32 : i32 to vector<8x128xi32>
    %99 = arith.cmpi slt, %67, %98 : vector<8x128xi32>
    %100 = arith.select %99, %90, %95 : vector<8x128xi1>, vector<8x128xf32>
    %101 = arith.select %97, %72, %100 : vector<8x128xi1>, vector<8x128xf32>
    %c0_46 = arith.constant 0 : index
    %c0_47 = arith.constant 0 : index
    %102 = vector.load %arg17[%c0_46, %c0_47] : memref<8x128xf32, #tpu.memory_space<vmem>>, vector<8x128xf32>
    tpu.vector_store %arg17[%c0_46, %c0_47], %101 {strides = array<i32>} : memref<8x128xf32, #tpu.memory_space<vmem>>, vector<8x128xf32>,
    %103 = arith.mulf %22, %22 : vector<8x8xf32>
    %cst_48 = arith.constant dense<0.000000e+00> : vector<8xf32>
    %104 = vector.multi_reduction <add>, %103, %cst_48 [1] : vector<8x8xf32> to vector<8xf32>
    %105 = vector.shape_cast %104 : vector<8xf32> to vector<8x1xf32>
    %cst_49 = arith.constant 1.000000e-24 : f32
    %106 = vector.broadcast %cst_49 : f32 to vector<8x1xf32>
    %107 = arith.maximumf %105, %106 : vector<8x1xf32>
    %108 = math.rsqrt %107 : vector<8x1xf32>
    %109 = vector.broadcast %108 : vector<8x1xf32> to vector<8x8xf32>
    %110 = arith.mulf %22, %109 : vector<8x8xf32>
    %111 = arith.truncf %110 : vector<8x8xf32> to vector<8x8xbf16>
    %c0_50 = arith.constant 0 : index
    %c0_51 = arith.constant 0 : index
    %112 = vector.load %arg16[%c0_50, %c0_51] : memref<8x128xbf16, #tpu.memory_space<vmem>>, vector<8x128xbf16>
    %cst_52 = arith.constant dense<0.000000e+00> : vector<8x128xf32>
    %113 = tpu.matmul %111, %112, %cst_52 {dimension_numbers = #tpu.dot_dimension_numbers<[1], [0], [0], [1], [0, 0, 1, 1], [], []>} : vector<8x8xbf16>, vector<8x128xbf16>, vector<8x128xf32> -> vector<8x128xf32>
    %c0_53 = arith.constant 0 : index
    %c0_54 = arith.constant 0 : index
    %114 = vector.load %arg18[%c0_53, %c0_54] : memref<8x128xf32, #tpu.memory_space<vmem>>, vector<8x128xf32>
    tpu.vector_store %arg18[%c0_53, %c0_54], %113 {strides = array<i32>} : memref<8x128xf32, #tpu.memory_space<vmem>>, vector<8x128xf32>,
    %c0_55 = arith.constant 0 : index
    %c0_56 = arith.constant 0 : index
    %115 = vector.load %arg18[%c0_55, %c0_56] : memref<8x128xf32, #tpu.memory_space<vmem>>, vector<8x8xf32>
    tpu.vector_store %arg18[%c0_55, %c0_56], %22 {strides = array<i32>} : memref<8x128xf32, #tpu.memory_space<vmem>>, vector<8x8xf32>,
    return
  }
  func.func @transform_0(%arg0: i32) -> (i32, i32) {
    %c0_i32 = arith.constant 0 : i32
    %c0_i32_0 = arith.constant 0 : i32
    return %arg0, %c0_i32 : i32, i32
  }
  func.func @transform_1(%arg0: i32) -> (i32, i32) {
    %c0_i32 = arith.constant 0 : i32
    %c0_i32_0 = arith.constant 0 : i32
    return %arg0, %c0_i32 : i32, i32
  }
  func.func @transform_2(%arg0: i32) -> (i32, i32) {
    %c0_i32 = arith.constant 0 : i32
    %c0_i32_0 = arith.constant 0 : i32
    %c0_i32_1 = arith.constant 0 : i32
    return %c0_i32, %c0_i32_0 : i32, i32
  }
  func.func @transform_3(%arg0: i32) -> (i32, i32) {
    %c0_i32 = arith.constant 0 : i32
    %c0_i32_0 = arith.constant 0 : i32
    %c0_i32_1 = arith.constant 0 : i32
    return %c0_i32, %c0_i32_0 : i32, i32
  }
  func.func @transform_4(%arg0: i32) -> (i32, i32) {
    %c0_i32 = arith.constant 0 : i32
    %c0_i32_0 = arith.constant 0 : i32
    %c0_i32_1 = arith.constant 0 : i32
    return %c0_i32, %c0_i32_0 : i32, i32
  }
  func.func @transform_5(%arg0: i32) -> (i32, i32) {
    %c0_i32 = arith.constant 0 : i32
    %c0_i32_0 = arith.constant 0 : i32
    %c0_i32_1 = arith.constant 0 : i32
    return %c0_i32, %c0_i32_0 : i32, i32
  }
  func.func @transform_6(%arg0: i32) -> (i32, i32) {
    %c0_i32 = arith.constant 0 : i32
    %c0_i32_0 = arith.constant 0 : i32
    %c0_i32_1 = arith.constant 0 : i32
    return %c0_i32, %c0_i32_0 : i32, i32
  }
  func.func @transform_7(%arg0: i32) -> (i32, i32) {
    %c0_i32 = arith.constant 0 : i32
    %c0_i32_0 = arith.constant 0 : i32
    %c0_i32_1 = arith.constant 0 : i32
    return %c0_i32, %c0_i32_0 : i32, i32
  }
  func.func @transform_8(%arg0: i32) -> (i32, i32) {
    %c0_i32 = arith.constant 0 : i32
    %c0_i32_0 = arith.constant 0 : i32
    %c0_i32_1 = arith.constant 0 : i32
    return %c0_i32, %c0_i32_0 : i32, i32
  }
  func.func @transform_9(%arg0: i32) -> (i32, i32) {
    %c0_i32 = arith.constant 0 : i32
    %c0_i32_0 = arith.constant 0 : i32
    %c0_i32_1 = arith.constant 0 : i32
    return %c0_i32, %c0_i32_0 : i32, i32
  }
  func.func @transform_10(%arg0: i32) -> (i32, i32) {
    %c0_i32 = arith.constant 0 : i32
    %c0_i32_0 = arith.constant 0 : i32
    %c0_i32_1 = arith.constant 0 : i32
    return %c0_i32, %c0_i32_0 : i32, i32
  }
  func.func @transform_11(%arg0: i32) -> (i32, i32) {
    %c0_i32 = arith.constant 0 : i32
    %c0_i32_0 = arith.constant 0 : i32
    %c0_i32_1 = arith.constant 0 : i32
    return %c0_i32, %c0_i32_0 : i32, i32
  }
  func.func @transform_12(%arg0: i32) -> (i32, i32) {
    %c0_i32 = arith.constant 0 : i32
    %c0_i32_0 = arith.constant 0 : i32
    %c0_i32_1 = arith.constant 0 : i32
    return %c0_i32, %c0_i32_0 : i32, i32
  }
  func.func @transform_13(%arg0: i32) -> (i32, i32) {
    %c0_i32 = arith.constant 0 : i32
    %c0_i32_0 = arith.constant 0 : i32
    %c0_i32_1 = arith.constant 0 : i32
    return %c0_i32, %c0_i32_0 : i32, i32
  }
  func.func @transform_14(%arg0: i32) -> (i32, i32) {
    %c0_i32 = arith.constant 0 : i32
    %c0_i32_0 = arith.constant 0 : i32
    %c0_i32_1 = arith.constant 0 : i32
    return %c0_i32, %c0_i32_0 : i32, i32
  }
  func.func @transform_15(%arg0: i32) -> (i32, i32) {
    %c0_i32 = arith.constant 0 : i32
    %c0_i32_0 = arith.constant 0 : i32
    %c0_i32_1 = arith.constant 0 : i32
    return %c0_i32, %c0_i32_0 : i32, i32
  }
  func.func @transform_16(%arg0: i32) -> (i32, i32) {
    %c0_i32 = arith.constant 0 : i32
    %c0_i32_0 = arith.constant 0 : i32
    return %arg0, %c0_i32 : i32, i32
  }
  func.func @transform_17(%arg0: i32) -> (i32, i32) {
    %c0_i32 = arith.constant 0 : i32
    %c0_i32_0 = arith.constant 0 : i32
    return %arg0, %c0_i32 : i32, i32
  }
}

</mosaic_0001>

<llo_original>
// kernel: tpu_custom_call.1
$region0: #{tpu_custom_call.1}
  #allocation0 [shape = 'u32[]', space=smem, size = 0x4, offset = 0x4, fixed_abs, tag = 'smem constant byte address 0x4 - core index']
  #allocation1 [shape = 'u32[144,128]{1,0:T(1,128)}', space=vmem, size = 0x12000, scoped, tag = 'internal scratch']
  %s0 = inlined_call_operand.hbm [shape: f32[8,32], index: 0, kind: input, shape index: {}]
  %s1 = inlined_call_operand.vmem [shape: s32[8,1], index: 1, kind: input, shape index: {}]
  %s2 = inlined_call_operand.vmem [shape: bf16[32,32], index: 2, kind: input, shape index: {}]
  %s3 = inlined_call_operand.hbm [shape: f32[1,32], index: 3, kind: input, shape index: {}]
  %s4 = inlined_call_operand.vmem [shape: bf16[32,16], index: 4, kind: input, shape index: {}]
  %s5 = inlined_call_operand.vmem [shape: f32[1,16], index: 5, kind: input, shape index: {}]
  %s6 = inlined_call_operand.vmem [shape: bf16[16,8], index: 6, kind: input, shape index: {}]
  %s7 = inlined_call_operand.vmem [shape: f32[1,8], index: 7, kind: input, shape index: {}]
  %s8 = inlined_call_operand.vmem [shape: bf16[8,16], index: 8, kind: input, shape index: {}]
  %s9 = inlined_call_operand.vmem [shape: f32[2,16], index: 9, kind: input, shape index: {}]
  %s10 = inlined_call_operand.vmem [shape: f32[1,16], index: 10, kind: input, shape index: {}]
  %s11 = inlined_call_operand.vmem [shape: bf16[16,32], index: 11, kind: input, shape index: {}]
  %s12 = inlined_call_operand.vmem [shape: f32[1,32], index: 12, kind: input, shape index: {}]
  %s13 = inlined_call_operand.vmem [shape: bf16[32,128], index: 13, kind: input, shape index: {}]
  %s14 = inlined_call_operand.vmem [shape: f32[1,128], index: 14, kind: input, shape index: {}]
  %s15 = inlined_call_operand.vmem [shape: bf16[8,128], index: 15, kind: input, shape index: {}]
  %s16 = inlined_call_operand.hbm [shape: f32[8,128], index: 16, kind: output, shape index: {0}]
  %s17 = inlined_call_operand.hbm [shape: f32[8,128], index: 17, kind: output, shape index: {1}]
  %18 = xla_tuple %s16, %s17
  %s19 = sld [smem:[#allocation0]]
  $region90: #{tpu_custom_call.1} parent=0
    _
  %s21 = ssub.s32 1, %s19
  %s22 = scalar_select 0, %s21, %s19
  $region1: #{tpu_custom_call.1} parent=0
    #allocation2 [shape = 'u8[4096]{0}', space=vmem, size = 0x1000, scoped, tag = 'input window, operand 0, single buffered']
    #allocation3 [shape = 's32[1]{0}', space=sflag, size = 0x4, scoped, tag = 'scoped memory for tpu_custom_call.1']
    #allocation4 [shape = 's32[1]{0}', space=sflag, size = 0x4, scoped, tag = 'scoped memory for tpu_custom_call.1']
    #allocation5 [shape = 'u8[512]{0}', space=vmem, size = 0x400, scoped, tag = 'input window, operand 3, single buffered']
    #allocation6 [shape = 's32[1]{0}', space=sflag, size = 0x4, scoped, tag = 'scoped memory for tpu_custom_call.1']
    #allocation7 [shape = 'u8[4096]{0}', space=vmem, size = 0x1000, scoped, tag = 'output window, operand 0, single buffered']
    #allocation8 [shape = 'u8[4096]{0}', space=vmem, size = 0x1000, scoped, tag = 'output window, operand 1, single buffered']
    #allocation9 [shape = 's32[1]{0}', space=sflag, size = 0x4, scoped, tag = 'scoped memory for tpu_custom_call.1']
    %23 = vsyncpa [#allocation3], 0
    %24 = vsyncpa [#allocation6], 0
    %25 = vsyncpa [#allocation4], 0
    %26 = vsyncpa [#allocation9], 0
    // Predicated region
    $region2: #{tpu_custom_call.1} parent=1 // pred_check
      _
    $region3: #{tpu_custom_call.1} parent=1 // pred_check_branch
      %28 = sbr.rel (0) target = $region5
    $region4: #{tpu_custom_call.1} parent=1 // pred_region
      %s30 = ssub.s32 128, 128
      %31 = vsyncadd [#allocation3], %s30
      %s33 = sshll.u32 [#allocation2], 4
      %s34 = int_to_ptr.vmem [resolvable:$true] %s33
      %36 = dma.hbm_to_vmem [thread:$0]  %s0, 128, %s34, [#allocation3]
    $region5: #{tpu_custom_call.1} parent=1 // pred_fallthru
      _
    // Predicated region
    $region6: #{tpu_custom_call.1} parent=1 // pred_check
      _
    $region7: #{tpu_custom_call.1} parent=1 // pred_check_branch
      %38 = sbr.rel (0) target = $region9
    $region8: #{tpu_custom_call.1} parent=1 // pred_region
      _
    $region9: #{tpu_custom_call.1} parent=1 // pred_fallthru
      _
    // Predicated region
    $region10: #{tpu_custom_call.1} parent=1 // pred_check
      _
    $region11: #{tpu_custom_call.1} parent=1 // pred_check_branch
      %40 = sbr.rel (0) target = $region13
    $region12: #{tpu_custom_call.1} parent=1 // pred_region
      _
    $region13: #{tpu_custom_call.1} parent=1 // pred_fallthru
      _
    // Predicated region
    $region14: #{tpu_custom_call.1} parent=1 // pred_check
      _
    $region15: #{tpu_custom_call.1} parent=1 // pred_check_branch
      %42 = sbr.rel (0) target = $region17
    $region16: #{tpu_custom_call.1} parent=1 // pred_region
      %s44 = ssub.s32 16, 16
      %45 = vsyncadd [#allocation6], %s44
      %s47 = sshll.u32 [#allocation5], 4
      %s48 = int_to_ptr.vmem [resolvable:$true] %s47
      %50 = dma.hbm_to_vmem [thread:$0]  %s3, 16, %s48, [#allocation6]
    $region17: #{tpu_custom_call.1} parent=1 // pred_fallthru
      _
    // Predicated region
    $region18: #{tpu_custom_call.1} parent=1 // pred_check
      _
    $region19: #{tpu_custom_call.1} parent=1 // pred_check_branch
      %52 = sbr.rel (0) target = $region21
    $region20: #{tpu_custom_call.1} parent=1 // pred_region
      _
    $region21: #{tpu_custom_call.1} parent=1 // pred_fallthru
      _
    // Predicated region
    $region22: #{tpu_custom_call.1} parent=1 // pred_check
      _
    $region23: #{tpu_custom_call.1} parent=1 // pred_check_branch
      %54 = sbr.rel (0) target = $region25
    $region24: #{tpu_custom_call.1} parent=1 // pred_region
      _
    $region25: #{tpu_custom_call.1} parent=1 // pred_fallthru
      _
    // Predicated region
    $region26: #{tpu_custom_call.1} parent=1 // pred_check
      _
    $region27: #{tpu_custom_call.1} parent=1 // pred_check_branch
      %56 = sbr.rel (0) target = $region29
    $region28: #{tpu_custom_call.1} parent=1 // pred_region
      _
    $region29: #{tpu_custom_call.1} parent=1 // pred_fallthru
      _
    // Predicated region
    $region30: #{tpu_custom_call.1} parent=1 // pred_check
      _
    $region31: #{tpu_custom_call.1} parent=1 // pred_check_branch
      %58 = sbr.rel (0) target = $region33
    $region32: #{tpu_custom_call.1} parent=1 // pred_region
      _
    $region33: #{tpu_custom_call.1} parent=1 // pred_fallthru
      _
    // Predicated region
    $region34: #{tpu_custom_call.1} parent=1 // pred_check
      _
    $region35: #{tpu_custom_call.1} parent=1 // pred_check_branch
      %60 = sbr.rel (0) target = $region37
    $region36: #{tpu_custom_call.1} parent=1 // pred_region
      _
    $region37: #{tpu_custom_call.1} parent=1 // pred_fallthru
      _
    // Predicated region
    $region38: #{tpu_custom_call.1} parent=1 // pred_check
      _
    $region39: #{tpu_custom_call.1} parent=1 // pred_check_branch
      %62 = sbr.rel (0) target = $region41
    $region40: #{tpu_custom_call.1} parent=1 // pred_region
      _
    $region41: #{tpu_custom_call.1} parent=1 // pred_fallthru
      _
    // Predicated region
    $region42: #{tpu_custom_call.1} parent=1 // pred_check
      _
    $region43: #{tpu_custom_call.1} parent=1 // pred_check_branch
      %64 = sbr.rel (0) target = $region45
    $region44: #{tpu_custom_call.1} parent=1 // pred_region
      _
    $region45: #{tpu_custom_call.1} parent=1 // pred_fallthru
      _
    // Predicated region
    $region46: #{tpu_custom_call.1} parent=1 // pred_check
      _
    $region47: #{tpu_custom_call.1} parent=1 // pred_check_branch
      %66 = sbr.rel (0) target = $region49
    $region48: #{tpu_custom_call.1} parent=1 // pred_region
      _
    $region49: #{tpu_custom_call.1} parent=1 // pred_fallthru
      _
    // Predicated region
    $region50: #{tpu_custom_call.1} parent=1 // pred_check
      _
    $region51: #{tpu_custom_call.1} parent=1 // pred_check_branch
      %68 = sbr.rel (0) target = $region53
    $region52: #{tpu_custom_call.1} parent=1 // pred_region
      _
    $region53: #{tpu_custom_call.1} parent=1 // pred_fallthru
      _
    // Predicated region
    $region54: #{tpu_custom_call.1} parent=1 // pred_check
      _
    $region55: #{tpu_custom_call.1} parent=1 // pred_check_branch
      %70 = sbr.rel (0) target = $region57
    $region56: #{tpu_custom_call.1} parent=1 // pred_region
      _
    $region57: #{tpu_custom_call.1} parent=1 // pred_fallthru
      _
    // Predicated region
    $region58: #{tpu_custom_call.1} parent=1 // pred_check
      _
    $region59: #{tpu_custom_call.1} parent=1 // pred_check_branch
      %72 = sbr.rel (0) target = $region61
    $region60: #{tpu_custom_call.1} parent=1 // pred_region
      _
    $region61: #{tpu_custom_call.1} parent=1 // pred_fallthru
      _
    // Predicated region
    $region62: #{tpu_custom_call.1} parent=1 // pred_check
      _
    $region63: #{tpu_custom_call.1} parent=1 // pred_check_branch
      %74 = sbr.rel (0) target = $region65
    $region64: #{tpu_custom_call.1} parent=1 // pred_region
      _
    $region65: #{tpu_custom_call.1} parent=1 // pred_fallthru
      _
    // Predicated region
    $region66: #{tpu_custom_call.1} parent=1 // pred_check
      _
    $region67: #{tpu_custom_call.1} parent=1 // pred_check_branch
      %76 = sbr.rel (0) target = $region69
    $region68: #{tpu_custom_call.1} parent=1 // pred_region
      %77 = dma.done [#allocation3], 128
    $region69: #{tpu_custom_call.1} parent=1 // pred_fallthru
      _
    // Predicated region
    $region70: #{tpu_custom_call.1} parent=1 // pred_check
      _
    $region71: #{tpu_custom_call.1} parent=1 // pred_check_branch
      %79 = sbr.rel (0) target = $region73
    $region72: #{tpu_custom_call.1} parent=1 // pred_region
      %80 = dma.done [#allocation6], 16
    $region73: #{tpu_custom_call.1} parent=1 // pred_fallthru
      _
    %v82 = vld [vmem:[#allocation2] sm:$0xff]
    %v83 = vpack.c.bf16 %v82, %v82
    %v84 = vld [vmem:[%s2] sm:$0xf]
    %v85 = vld [vmem:[%s2 + $0x4] sm:$0xf]
    %v86 = vld [vmem:[%s2 + $0x8] sm:$0xf]
    %v87 = vld [vmem:[%s2 + $0xc] sm:$0xf]
    %v88 = vld [vmem:[#allocation5] sm:$0x1]
    %v90 = vlaneseq
    %v91 = vshrl.u32 %v90, 7
    %v92 = vsub.s32 0, %v91
    %v93 = vrot.slane %v88, %v92
    %v99 = vunpack.c.l.b16 %v84
    %v100 = vunpack.c.l.b16 %v85
    %v101 = vunpack.c.l.b16 %v86
    %v102 = vunpack.c.l.b16 %v87
    %v103 = vpack.c.b16 %v100, %v99
    %v104 = vpack.c.b16 %v102, %v101
    %vm107 = vcmask 261120
    %v109 = vsel %vm107, %v83, 0
    %111 = vmatprep.subr.bf16.mxu0 0
    %112 = vmatpush1.bf16.msra.mxu0 %v103
    %113 = vmatprep.subr.bf16.mxu0 0
    %114 = vmatpush1.bf16.msra.mxu0 %v104
    %115 = vmatprep.subr.bf16.mxu0 0
    %116 = vmatpush1.bf16.msra.mxu0 0
    %117 = vmatprep.subr.bf16.mxu0 0
    %118 = vmatpush1.bf16.msra.mxu0 0
    %119 = vmatprep.subr.bf16.mxu0 0
    %120 = vmatpush1.bf16.msra.mxu0 0
    %121 = vmatprep.subr.bf16.mxu0 0
    %122 = vmatpush1.bf16.msra.mxu0 0
    %123 = vmatprep.subr.bf16.mxu0 0
    %124 = vmatpush1.bf16.msra.mxu0 0
    %125 = vmatprep.subr.bf16.mxu0 0
    %126 = vmatpush1.bf16.msra.mxu0 0
    %127 = vmatprep.subr.bf16.mxu0 0
    %128 = vmatpush1.bf16.msra.mxu0 0
    %129 = vmatprep.subr.bf16.mxu0 0
    %130 = vmatpush1.bf16.msra.mxu0 0
    %131 = vmatprep.subr.bf16.mxu0 0
    %132 = vmatpush1.bf16.msra.mxu0 0
    %133 = vmatprep.subr.bf16.mxu0 0
    %134 = vmatpush1.bf16.msra.mxu0 0
    %135 = vmatprep.subr.bf16.mxu0 0
    %136 = vmatpush1.bf16.msra.mxu0 0
    %137 = vmatprep.subr.bf16.mxu0 0
    %138 = vmatpush1.bf16.msra.mxu0 0
    %139 = vmatprep.subr.bf16.mxu0 0
    %140 = vmatpush1.bf16.msra.mxu0 0
    %141 = vmatprep.subr.bf16.mxu0 0
    %142 = vmatpush1.bf16.msra.mxu0 0
    %143 = vmatprep.mubr.bf16.mxu0 0
    %144 = vmatmul.mubr.bf16.gmra.mrb[0].mxu0 %v109
    %v145 = vpop.f32.mrb[0].mxu0
    %v146 = vadd.f32 %v93, %v145
    %v147 = vpop.f32.mrb[0].mxu0
    %v148 = vpop.f32.mrb[0].mxu0
    %v149 = vpop.f32.mrb[0].mxu0
    %150 = vdwg.mxu0
    %v151 = vmax.f32 %v146, 0.0
    %v152 = vpack.c.bf16 %v151, %v151
    %v153 = vld [vmem:[%s4] sm:$0xf]
    %v154 = vld [vmem:[%s4 + $0x4] sm:$0xf]
    %v155 = vld [vmem:[%s4 + $0x8] sm:$0xf]
    %v156 = vld [vmem:[%s4 + $0xc] sm:$0xf]
    %v157 = vld [vmem:[%s5] sm:$0x1]
    %v159 = vlaneseq
    %v160 = vshrl.u32 %v159, 7
    %v161 = vsub.s32 0, %v160
    %v162 = vrot.slane %v157, %v161
    %v168 = vunpack.c.l.b16 %v153
    %v169 = vunpack.c.l.b16 %v154
    %v170 = vunpack.c.l.b16 %v155
    %v171 = vunpack.c.l.b16 %v156
    %v172 = vpack.c.b16 %v169, %v168
    %v173 = vpack.c.b16 %v171, %v170
    %v177 = vsel %vm107, %v152, 0
    %179 = vmatprep.subr.bf16.mxu0 0
    %180 = vmatpush1.bf16.msra.mxu0 %v172
    %181 = vmatprep.subr.bf16.mxu0 0
    %182 = vmatpush1.bf16.msra.mxu0 %v173
    %183 = vmatprep.subr.bf16.mxu0 0
    %184 = vmatpush1.bf16.msra.mxu0 0
    %185 = vmatprep.subr.bf16.mxu0 0
    %186 = vmatpush1.bf16.msra.mxu0 0
    %187 = vmatprep.subr.bf16.mxu0 0
    %188 = vmatpush1.bf16.msra.mxu0 0
    %189 = vmatprep.subr.bf16.mxu0 0
    %190 = vmatpush1.bf16.msra.mxu0 0
    %191 = vmatprep.subr.bf16.mxu0 0
    %192 = vmatpush1.bf16.msra.mxu0 0
    %193 = vmatprep.subr.bf16.mxu0 0
    %194 = vmatpush1.bf16.msra.mxu0 0
    %195 = vmatprep.subr.bf16.mxu0 0
    %196 = vmatpush1.bf16.msra.mxu0 0
    %197 = vmatprep.subr.bf16.mxu0 0
    %198 = vmatpush1.bf16.msra.mxu0 0
    %199 = vmatprep.subr.bf16.mxu0 0
    %200 = vmatpush1.bf16.msra.mxu0 0
    %201 = vmatprep.subr.bf16.mxu0 0
    %202 = vmatpush1.bf16.msra.mxu0 0
    %203 = vmatprep.subr.bf16.mxu0 0
    %204 = vmatpush1.bf16.msra.mxu0 0
    %205 = vmatprep.subr.bf16.mxu0 0
    %206 = vmatpush1.bf16.msra.mxu0 0
    %207 = vmatprep.subr.bf16.mxu0 0
    %208 = vmatpush1.bf16.msra.mxu0 0
    %209 = vmatprep.subr.bf16.mxu0 0
    %210 = vmatpush1.bf16.msra.mxu0 0
    %211 = vmatprep.mubr.bf16.mxu0 0
    %212 = vmatmul.mubr.bf16.gmra.mrb[0].mxu0 %v177
    %v213 = vpop.f32.mrb[0].mxu0
    %v214 = vadd.f32 %v162, %v213
    %v215 = vpop.f32.mrb[0].mxu0
    %v216 = vpop.f32.mrb[0].mxu0
    %v217 = vpop.f32.mrb[0].mxu0
    %218 = vdwg.mxu0
    %v219 = vmax.f32 %v214, 0.0
    %v220 = vpack.c.bf16 %v219, %v219
    %v221 = vld [vmem:[%s6] sm:$0xf]
    %v222 = vld [vmem:[%s6 + $0x4] sm:$0xf]
    %v223 = vld [vmem:[%s7] sm:$0x1]
    %v225 = vlaneseq
    %v226 = vshrl.u32 %v225, 7
    %v227 = vsub.s32 0, %v226
    %v228 = vrot.slane %v223, %v227
    %v232 = vunpack.c.l.b16 %v221
    %v233 = vunpack.c.l.b16 %v222
    %v234 = vpack.c.b16 %v233, %v232
    %vm236 = vcmask 130048
    %v238 = vsel %vm236, %v220, 0
    %240 = vmatprep.subr.bf16.mxu0 0
    %241 = vmatpush1.bf16.msra.mxu0 %v234
    %242 = vmatprep.subr.bf16.mxu0 0
    %243 = vmatpush1.bf16.msra.mxu0 0
    %244 = vmatprep.subr.bf16.mxu0 0
    %245 = vmatpush1.bf16.msra.mxu0 0
    %246 = vmatprep.subr.bf16.mxu0 0
    %247 = vmatpush1.bf16.msra.mxu0 0
    %248 = vmatprep.subr.bf16.mxu0 0
    %249 = vmatpush1.bf16.msra.mxu0 0
    %250 = vmatprep.subr.bf16.mxu0 0
    %251 = vmatpush1.bf16.msra.mxu0 0
    %252 = vmatprep.subr.bf16.mxu0 0
    %253 = vmatpush1.bf16.msra.mxu0 0
    %254 = vmatprep.subr.bf16.mxu0 0
    %255 = vmatpush1.bf16.msra.mxu0 0
    %256 = vmatprep.subr.bf16.mxu0 0
    %257 = vmatpush1.bf16.msra.mxu0 0
    %258 = vmatprep.subr.bf16.mxu0 0
    %259 = vmatpush1.bf16.msra.mxu0 0
    %260 = vmatprep.subr.bf16.mxu0 0
    %261 = vmatpush1.bf16.msra.mxu0 0
    %262 = vmatprep.subr.bf16.mxu0 0
    %263 = vmatpush1.bf16.msra.mxu0 0
    %264 = vmatprep.subr.bf16.mxu0 0
    %265 = vmatpush1.bf16.msra.mxu0 0
    %266 = vmatprep.subr.bf16.mxu0 0
    %267 = vmatpush1.bf16.msra.mxu0 0
    %268 = vmatprep.subr.bf16.mxu0 0
    %269 = vmatpush1.bf16.msra.mxu0 0
    %270 = vmatprep.subr.bf16.mxu0 0
    %271 = vmatpush1.bf16.msra.mxu0 0
    %272 = vmatprep.mubr.bf16.mxu0 0
    %273 = vmatmul.mubr.bf16.gmra.mrb[0].mxu0 %v238
    %v274 = vpop.f32.mrb[0].mxu0
    %v275 = vadd.f32 %v228, %v274
    %v276 = vpop.f32.mrb[0].mxu0
    %v277 = vpop.f32.mrb[0].mxu0
    %v278 = vpop.f32.mrb[0].mxu0
    %279 = vdwg.mxu0
    %v280 = vld [vmem:[%s1] sm:$0xff]
    %v281 = vld [vmem:[%s9] sm:$0x3]
    %vm282 = vcmp.eq.s32.totalorder %v280, 0
    %v283 = vsel %vm282, 1, 0
    %v284 = vcvt.s32.f32 %v283
    %286 = vset.pattern.permute.xlu0 0
    %287 = vperm.xlu0 %286, %v284
    %v288 = vpop.permute.xlu0 %287
    %v290 = vlaneseq
    %v291 = vshrl.u32 %v290, 7
    %v292 = vsub.s32 0, %v291
    %v293 = vrot.slane %v281, %v292
    %v294 = vmul.f32 %v288, %v293
    %v295 = vadd.f32 %v294, 0.0
    %vm296 = vcmp.eq.s32.totalorder %v280, 1
    %v297 = vsel %vm296, 1, 0
    %v298 = vcvt.s32.f32 %v297
    %300 = vset.pattern.permute.xlu0 0
    %301 = vperm.xlu0 %300, %v298
    %v302 = vpop.permute.xlu0 %301
    %v304 = vlaneseq
    %v305 = vshrl.u32 %v304, 7
    %v306 = vsub.s32 1, %v305
    %v307 = vrot.slane %v281, %v306
    %v308 = vmul.f32 %v302, %v307
    %v309 = vadd.f32 %v295, %v308
    %v310 = vpack.c.bf16 %v275, %v275
    %v311 = vld [vmem:[%s8] sm:$0xf]
    %v312 = vld [vmem:[%s10] sm:$0x1]
    %v314 = vlaneseq
    %v315 = vshrl.u32 %v314, 7
    %v316 = vsub.s32 0, %v315
    %v317 = vrot.slane %v312, %v316
    %vm319 = vcmask 64512
    %v321 = vsel %vm319, %v310, 0
    %vm323 = vcmask 1043456
    %v325 = vsel %vm323, %v311, 0
    %327 = vmatprep.subr.bf16.mxu0 0
    %328 = vmatpush1.bf16.msra.mxu0 %v325
    %329 = vmatprep.subr.bf16.mxu0 0
    %330 = vmatpush1.bf16.msra.mxu0 0
    %331 = vmatprep.subr.bf16.mxu0 0
    %332 = vmatpush1.bf16.msra.mxu0 0
    %333 = vmatprep.subr.bf16.mxu0 0
    %334 = vmatpush1.bf16.msra.mxu0 0
    %335 = vmatprep.subr.bf16.mxu0 0
    %336 = vmatpush1.bf16.msra.mxu0 0
    %337 = vmatprep.subr.bf16.mxu0 0
    %338 = vmatpush1.bf16.msra.mxu0 0
    %339 = vmatprep.subr.bf16.mxu0 0
    %340 = vmatpush1.bf16.msra.mxu0 0
    %341 = vmatprep.subr.bf16.mxu0 0
    %342 = vmatpush1.bf16.msra.mxu0 0
    %343 = vmatprep.subr.bf16.mxu0 0
    %344 = vmatpush1.bf16.msra.mxu0 0
    %345 = vmatprep.subr.bf16.mxu0 0
    %346 = vmatpush1.bf16.msra.mxu0 0
    %347 = vmatprep.subr.bf16.mxu0 0
    %348 = vmatpush1.bf16.msra.mxu0 0
    %349 = vmatprep.subr.bf16.mxu0 0
    %350 = vmatpush1.bf16.msra.mxu0 0
    %351 = vmatprep.subr.bf16.mxu0 0
    %352 = vmatpush1.bf16.msra.mxu0 0
    %353 = vmatprep.subr.bf16.mxu0 0
    %354 = vmatpush1.bf16.msra.mxu0 0
    %355 = vmatprep.subr.bf16.mxu0 0
    %356 = vmatpush1.bf16.msra.mxu0 0
    %357 = vmatprep.subr.bf16.mxu0 0
    %358 = vmatpush1.bf16.msra.mxu0 0
    %359 = vmatprep.mubr.bf16.mxu0 0
    %360 = vmatmul.mubr.bf16.gmra.mrb[0].mxu0 %v321
    %v361 = vpop.f32.mrb[0].mxu0
    %v362 = vadd.f32 %v317, %v361
    %v363 = vpop.f32.mrb[0].mxu0
    %v364 = vpop.f32.mrb[0].mxu0
    %v365 = vpop.f32.mrb[0].mxu0
    %366 = vdwg.mxu0
    %v367 = vadd.f32 %v362, %v309
    %v368 = vmax.f32 %v367, 0.0
    %v369 = vpack.c.bf16 %v368, %v368
    %v370 = vld [vmem:[%s11] sm:$0xf]
    %v371 = vld [vmem:[%s11 + $0x4] sm:$0xf]
    %v372 = vld [vmem:[%s12] sm:$0x1]
    %v374 = vlaneseq
    %v375 = vshrl.u32 %v374, 7
    %v376 = vsub.s32 0, %v375
    %v377 = vrot.slane %v372, %v376
    %v381 = vunpack.c.l.b16 %v370
    %v382 = vunpack.c.l.b16 %v371
    %v383 = vpack.c.b16 %v382, %v381
    %v386 = vsel %vm236, %v369, 0
    %388 = vmatprep.subr.bf16.mxu0 0
    %389 = vmatpush1.bf16.msra.mxu0 %v383
    %390 = vmatprep.subr.bf16.mxu0 0
    %391 = vmatpush1.bf16.msra.mxu0 0
    %392 = vmatprep.subr.bf16.mxu0 0
    %393 = vmatpush1.bf16.msra.mxu0 0
    %394 = vmatprep.subr.bf16.mxu0 0
    %395 = vmatpush1.bf16.msra.mxu0 0
    %396 = vmatprep.subr.bf16.mxu0 0
    %397 = vmatpush1.bf16.msra.mxu0 0
    %398 = vmatprep.subr.bf16.mxu0 0
    %399 = vmatpush1.bf16.msra.mxu0 0
    %400 = vmatprep.subr.bf16.mxu0 0
    %401 = vmatpush1.bf16.msra.mxu0 0
    %402 = vmatprep.subr.bf16.mxu0 0
    %403 = vmatpush1.bf16.msra.mxu0 0
    %404 = vmatprep.subr.bf16.mxu0 0
    %405 = vmatpush1.bf16.msra.mxu0 0
    %406 = vmatprep.subr.bf16.mxu0 0
    %407 = vmatpush1.bf16.msra.mxu0 0
    %408 = vmatprep.subr.bf16.mxu0 0
    %409 = vmatpush1.bf16.msra.mxu0 0
    %410 = vmatprep.subr.bf16.mxu0 0
    %411 = vmatpush1.bf16.msra.mxu0 0
    %412 = vmatprep.subr.bf16.mxu0 0
    %413 = vmatpush1.bf16.msra.mxu0 0
    %414 = vmatprep.subr.bf16.mxu0 0
    %415 = vmatpush1.bf16.msra.mxu0 0
    %416 = vmatprep.subr.bf16.mxu0 0
    %417 = vmatpush1.bf16.msra.mxu0 0
    %418 = vmatprep.subr.bf16.mxu0 0
    %419 = vmatpush1.bf16.msra.mxu0 0
    %420 = vmatprep.mubr.bf16.mxu0 0
    %421 = vmatmul.mubr.bf16.gmra.mrb[0].mxu0 %v386
    %v422 = vpop.f32.mrb[0].mxu0
    %v423 = vadd.f32 %v377, %v422
    %v424 = vpop.f32.mrb[0].mxu0
    %v425 = vpop.f32.mrb[0].mxu0
    %v426 = vpop.f32.mrb[0].mxu0
    %427 = vdwg.mxu0
    %v428 = vmax.f32 %v423, 0.0
    %v429 = vpack.c.bf16 %v428, %v428
    %v430 = vld [vmem:[%s13] sm:$0xf]
    %v431 = vld [vmem:[%s13 + $0x4] sm:$0xf]
    %v432 = vld [vmem:[%s13 + $0x8] sm:$0xf]
    %v433 = vld [vmem:[%s13 + $0xc] sm:$0xf]
    %v434 = vld [vmem:[%s14] sm:$0x1]
    %v436 = vlaneseq
    %v437 = vshrl.u32 %v436, 7
    %v438 = vsub.s32 0, %v437
    %v439 = vrot.slane %v434, %v438
    %v445 = vunpack.c.l.b16 %v430
    %v446 = vunpack.c.l.b16 %v431
    %v447 = vunpack.c.l.b16 %v432
    %v448 = vunpack.c.l.b16 %v433
    %v449 = vpack.c.b16 %v446, %v445
    %v450 = vpack.c.b16 %v448, %v447
    %v454 = vsel %vm107, %v429, 0
    %456 = vmatprep.subr.bf16.mxu0 0
    %457 = vmatpush1.bf16.msra.mxu0 %v449
    %458 = vmatprep.subr.bf16.mxu0 0
    %459 = vmatpush1.bf16.msra.mxu0 %v450
    %460 = vmatprep.subr.bf16.mxu0 0
    %461 = vmatpush1.bf16.msra.mxu0 0
    %462 = vmatprep.subr.bf16.mxu0 0
    %463 = vmatpush1.bf16.msra.mxu0 0
    %464 = vmatprep.subr.bf16.mxu0 0
    %465 = vmatpush1.bf16.msra.mxu0 0
    %466 = vmatprep.subr.bf16.mxu0 0
    %467 = vmatpush1.bf16.msra.mxu0 0
    %468 = vmatprep.subr.bf16.mxu0 0
    %469 = vmatpush1.bf16.msra.mxu0 0
    %470 = vmatprep.subr.bf16.mxu0 0
    %471 = vmatpush1.bf16.msra.mxu0 0
    %472 = vmatprep.subr.bf16.mxu0 0
    %473 = vmatpush1.bf16.msra.mxu0 0
    %474 = vmatprep.subr.bf16.mxu0 0
    %475 = vmatpush1.bf16.msra.mxu0 0
    %476 = vmatprep.subr.bf16.mxu0 0
    %477 = vmatpush1.bf16.msra.mxu0 0
    %478 = vmatprep.subr.bf16.mxu0 0
    %479 = vmatpush1.bf16.msra.mxu0 0
    %480 = vmatprep.subr.bf16.mxu0 0
    %481 = vmatpush1.bf16.msra.mxu0 0
    %482 = vmatprep.subr.bf16.mxu0 0
    %483 = vmatpush1.bf16.msra.mxu0 0
    %484 = vmatprep.subr.bf16.mxu0 0
    %485 = vmatpush1.bf16.msra.mxu0 0
    %486 = vmatprep.subr.bf16.mxu0 0
    %487 = vmatpush1.bf16.msra.mxu0 0
    %488 = vmatprep.mubr.bf16.mxu0 0
    %489 = vmatmul.mubr.bf16.gmra.mrb[0].mxu0 %v454
    %v490 = vpop.f32.mrb[0].mxu0
    %v491 = vadd.f32 %v439, %v490
    %v492 = vpop.f32.mrb[0].mxu0
    %v493 = vpop.f32.mrb[0].mxu0
    %v494 = vpop.f32.mrb[0].mxu0
    %495 = vdwg.mxu0
    %v496 = vlaneseq
    %v497 = vand.u32 %v496, 127
    %v498 = vmul.f32 %v491, 1.442695
    %v499 = vpow.pop %v498
    %v500 = vmax.f32 %v499, 1e-05
    %v501 = vmin.f32 %v500, 1000000.0
    %v502 = vmax.f32 %v491, 0.0
    %vm503 = vcmp.ne.f32.partialorder %v491, %v491
    %v504 = vadd.f32 %v491, 0.0
    %v505 = vand.u32 2147483647, %v491
    %v506 = vsub.f32 0.0, %v505
    %v507 = vmul.f32 %v506, 1.442695
    %v508 = vpow.pop %v507
    %v509 = vadd.f32 %v508, 1.0
    %v510 = vlog2.pop %v509
    %v511 = vmul.f32 %v510, 0.6931472
    %v512 = vmul.f32 -0.5, %v508
    %v513 = vadd.f32 %v512, 1.0
    %v514 = vmul.f32 %v513, %v508
    %v515 = vand.u32 2147483647, %v508
    %vm516 = vcmp.lt.f32.partialorder %v515, 0.0004427343
    %v517 = vsel %vm516, %v514, %v511
    %v518 = vadd.f32 %v502, %v517
    %v519 = vsel %vm503, %v504, %v518
    %v520 = vmax.f32 %v519, 0.0001
    %v521 = vmin.f32 %v520, 10000.0
    %v522 = vxor.u32 %v491, 2147483648
    %v523 = vmul.f32 %v522, 1.442695
    %v524 = vpow.pop %v523
    %v525 = vadd.f32 %v524, 1.0
    %v526 = vrcp.pop %v525
    %v527 = vmul.f32 1.0, %v526
    %vm528 = vcmp.lt.s32.totalorder %v497, 32
    %vm529 = vcmp.lt.s32.totalorder %v497, 64
    %v530 = vsel %vm529, %v521, %v527
    %v531 = vsel %vm528, %v501, %v530
    %532 = vst [vmem:[#allocation7] sm:$0xff] %v531
    %v533 = vmul.f32 %v275, %v275
    %v534 = vsel %vm319, %v533, 0.0
    %535 = vadd.xlane.f32.xlu0 %v534
    %v536 = vpop.xlane.xlu0 %535
    %v537 = vmax.f32 %v536, 1e-24
    %v538 = vrsqrt.pop %v537
    %v539 = vmul.f32 %v275, %v538
    %v540 = vpack.c.bf16 %v539, %v539
    %v541 = vld [vmem:[%s15] sm:$0xf]
    %v543 = vsel %vm319, %v540, 0
    %v546 = vsel %vm323, %v541, 0
    %548 = vmatprep.subr.bf16.mxu0 0
    %549 = vmatpush1.bf16.msra.mxu0 %v546
    %550 = vmatprep.subr.bf16.mxu0 0
    %551 = vmatpush1.bf16.msra.mxu0 0
    %552 = vmatprep.subr.bf16.mxu0 0
    %553 = vmatpush1.bf16.msra.mxu0 0
    %554 = vmatprep.subr.bf16.mxu0 0
    %555 = vmatpush1.bf16.msra.mxu0 0
    %556 = vmatprep.subr.bf16.mxu0 0
    %557 = vmatpush1.bf16.msra.mxu0 0
    %558 = vmatprep.subr.bf16.mxu0 0
    %559 = vmatpush1.bf16.msra.mxu0 0
    %560 = vmatprep.subr.bf16.mxu0 0
    %561 = vmatpush1.bf16.msra.mxu0 0
    %562 = vmatprep.subr.bf16.mxu0 0
    %563 = vmatpush1.bf16.msra.mxu0 0
    %564 = vmatprep.subr.bf16.mxu0 0
    %565 = vmatpush1.bf16.msra.mxu0 0
    %566 = vmatprep.subr.bf16.mxu0 0
    %567 = vmatpush1.bf16.msra.mxu0 0
    %568 = vmatprep.subr.bf16.mxu0 0
    %569 = vmatpush1.bf16.msra.mxu0 0
    %570 = vmatprep.subr.bf16.mxu0 0
    %571 = vmatpush1.bf16.msra.mxu0 0
    %572 = vmatprep.subr.bf16.mxu0 0
    %573 = vmatpush1.bf16.msra.mxu0 0
    %574 = vmatprep.subr.bf16.mxu0 0
    %575 = vmatpush1.bf16.msra.mxu0 0
    %576 = vmatprep.subr.bf16.mxu0 0
    %577 = vmatpush1.bf16.msra.mxu0 0
    %578 = vmatprep.subr.bf16.mxu0 0
    %579 = vmatpush1.bf16.msra.mxu0 0
    %580 = vmatprep.mubr.bf16.mxu0 0
    %581 = vmatmul.mubr.bf16.gmra.mrb[0].mxu0 %v543
    %v582 = vpop.f32.mrb[0].mxu0
    %v583 = vadd.f32 0.0, %v582
    %v584 = vpop.f32.mrb[0].mxu0
    %v585 = vpop.f32.mrb[0].mxu0
    %v586 = vpop.f32.mrb[0].mxu0
    %587 = vdwg.mxu0
    %588 = vst [vmem:[#allocation8] sm:$0xff] %v583
    %589 = vst.msk [vmem:[#allocation8] sm:$0xff] %vm319, %v275
    // Predicated region
    $region74: #{tpu_custom_call.1} parent=1 // pred_check
      _
    $region75: #{tpu_custom_call.1} parent=1 // pred_check_branch
      %591 = sbr.rel (0) target = $region77
    $region76: #{tpu_custom_call.1} parent=1 // pred_region
      %s593 = ssub.s32 128, 128
      %594 = vsyncadd [#allocation4], %s593
      %s596 = sshll.u32 [#allocation7], 4
      %s597 = int_to_ptr.vmem [resolvable:$true] %s596
      %599 = dma.vmem_to_hbm [thread:$0]  %s597, 128, %s16, [#allocation4]
    $region77: #{tpu_custom_call.1} parent=1 // pred_fallthru
      _
    // Predicated region
    $region78: #{tpu_custom_call.1} parent=1 // pred_check
      _
    $region79: #{tpu_custom_call.1} parent=1 // pred_check_branch
      %601 = sbr.rel (0) target = $region81
    $region80: #{tpu_custom_call.1} parent=1 // pred_region
      %s603 = ssub.s32 128, 128
      %604 = vsyncadd [#allocation9], %s603
      %s606 = sshll.u32 [#allocation8], 4
      %s607 = int_to_ptr.vmem [resolvable:$true] %s606
      %609 = dma.vmem_to_hbm [thread:$0]  %s607, 128, %s17, [#allocation9]
    $region81: #{tpu_custom_call.1} parent=1 // pred_fallthru
      _
    // Predicated region
    $region82: #{tpu_custom_call.1} parent=1 // pred_check
      _
    $region83: #{tpu_custom_call.1} parent=1 // pred_check_branch
      %611 = sbr.rel (0) target = $region85
    $region84: #{tpu_custom_call.1} parent=1 // pred_region
      %612 = dma.done [#allocation4], 128
    $region85: #{tpu_custom_call.1} parent=1 // pred_fallthru
      _
    // Predicated region
    $region86: #{tpu_custom_call.1} parent=1 // pred_check
      _
    $region87: #{tpu_custom_call.1} parent=1 // pred_check_branch
      %614 = sbr.rel (0) target = $region89
    $region88: #{tpu_custom_call.1} parent=1 // pred_region
      %615 = dma.done [#allocation9], 128
    $region89: #{tpu_custom_call.1} parent=1 // pred_fallthru
      _
    %616 = vsyncpa [#allocation3], 1
    %617 = vsyncpa [#allocation6], 1
    %618 = vsyncpa [#allocation4], 1
    %619 = vsyncpa [#allocation9], 1

</llo_original>
